<compile_context>
chip_gen: v7x
topology: tpu7x:2x2x1
jax: 0.10.0
libtpu: 0.0.40
codegen_flags: <defaults>
</compile_context>

<pallas_src>
import math

import jax
import jax.numpy as jnp
from jax.experimental import pallas as pl
from jax.experimental.pallas import tpu as pltpu

_SQRT_2_OVER_PI = math.sqrt(2.0 / math.pi)
_LN_EPS = 1e-5


def _gelu_tanh(x):
    # 0.5 * x * (1 + tanh(sqrt(2/pi) * (x + 0.044715 * x^3)))
    return 0.5 * x * (1.0 + jnp.tanh(_SQRT_2_OVER_PI * (x + 0.044715 * x * x * x)))


def _ffn_kernel(x_ref, w1_ref, b1_ref, w2_ref, b2_ref, g_ref, beta_ref, o_ref):
    # MXU path in the (low-precision) weight dtype, f32 accumulation.
    x_mm = x_ref[...].astype(w1_ref.dtype)                     # (tm, d_in)
    x_f32 = x_ref[...].astype(jnp.float32)

    # w_1: 1x1 conv == x @ W1 + b1  (d_in -> d_hid), then GELU (tanh approx, f32)
    h = jnp.dot(x_mm, w1_ref[...], preferred_element_type=jnp.float32)
    h = _gelu_tanh(h + b1_ref[...])                            # (tm, d_hid), f32

    # w_2: 1x1 conv == h @ W2 + b2  (d_hid -> d_in)
    y = jnp.dot(h.astype(w2_ref.dtype), w2_ref[...],
                preferred_element_type=jnp.float32) + b2_ref[...]

    # TODO(synk): dropout is identity at inference; training-mode dropout not implemented.
    y = y + x_f32                                              # residual (f32)

    # LayerNorm over the feature axis, eps = 1e-5 (f32 math)
    mean = jnp.mean(y, axis=-1, keepdims=True)
    centered = y - mean
    var = jnp.mean(centered * centered, axis=-1, keepdims=True)
    out = centered * jax.lax.rsqrt(var + _LN_EPS) * g_ref[...] + beta_ref[...]

    o_ref[...] = out.astype(o_ref.dtype)


def _round_up(x, m):
    return (x + m - 1) // m * m


def positionwise_feed_forward(x, w1, b1, w2, b2, gamma, beta, *,
                              tm=256, matmul_dtype=jnp.bfloat16):
    """x: (B, L, d_in). w1: (d_in, d_hid), b1: (d_hid,), w2: (d_hid, d_in),
    b2: (d_in,), gamma/beta: (d_in,). Returns (B, L, d_in)."""
    B, L, d_in = x.shape
    d_hid = w1.shape[1]

    rows = B * L
    # Large row tile for MXU utilization, but never bigger than the (8-aligned)
    # row count so tiny inputs aren't massively over-padded.
    tm_eff = min(tm, _round_up(rows, 8))
    rows_p = _round_up(rows, tm_eff)

    x2d = x.reshape(rows, d_in)
    if rows_p != rows:
        # Zero-pad tail rows; they are computed (harmlessly) and sliced off below.
        x2d = jnp.pad(x2d, ((0, rows_p - rows), (0, 0)))

    w1c = w1.astype(matmul_dtype)
    w2c = w2.astype(matmul_dtype)
    b1_2d = b1.reshape(1, d_hid).astype(jnp.float32)
    b2_2d = b2.reshape(1, d_in).astype(jnp.float32)
    g_2d = gamma.reshape(1, d_in).astype(jnp.float32)
    beta_2d = beta.reshape(1, d_in).astype(jnp.float32)

    grid = (rows_p // tm_eff,)

    bytes_in = x2d.size * x2d.dtype.itemsize
    bytes_w = ((w1c.size + w2c.size) * w1c.dtype.itemsize
               + (b1_2d.size + b2_2d.size + g_2d.size + beta_2d.size) * 4)
    bytes_out = rows_p * d_in * x.dtype.itemsize
    cost = pl.CostEstimate(
        flops=4 * rows_p * d_in * d_hid,                # two matmuls
        transcendentals=rows_p * (d_hid + 1),           # tanh per hidden elem + rsqrt per row
        bytes_accessed=bytes_in + bytes_w + bytes_out,
    )

    out2d = pl.pallas_call(
        _ffn_kernel,
        out_shape=jax.ShapeDtypeStruct((rows_p, d_in), x.dtype),
        grid_spec=pltpu.PrefetchScalarGridSpec(
            num_scalar_prefetch=0,
            grid=grid,
            in_specs=[
                pl.BlockSpec((tm_eff, d_in), lambda i: (i, 0)),   # x rows tile
                pl.BlockSpec((d_in, d_hid), lambda i: (0, 0)),    # W1 (resident)
                pl.BlockSpec((1, d_hid), lambda i: (0, 0)),       # b1
                pl.BlockSpec((d_hid, d_in), lambda i: (0, 0)),    # W2 (resident)
                pl.BlockSpec((1, d_in), lambda i: (0, 0)),        # b2
                pl.BlockSpec((1, d_in), lambda i: (0, 0)),        # LN gamma
                pl.BlockSpec((1, d_in), lambda i: (0, 0)),        # LN beta
            ],
            out_specs=pl.BlockSpec((tm_eff, d_in), lambda i: (i, 0)),
        ),
        compiler_params=pltpu.CompilerParams(
            dimension_semantics=("parallel",),
            vmem_limit_bytes=64 * 1024 * 1024,
        ),
        cost_estimate=cost,
    )(x2d, w1c, b1_2d, w2c, b2_2d, g_2d, beta_2d)

    if rows_p != rows:
        out2d = out2d[:rows]
    return out2d.reshape(B, L, d_in)


def _reference(x, w1, b1, w2, b2, gamma, beta, matmul_dtype=None):
    """Pure-JAX reference. If matmul_dtype is given, mimics the kernel's
    low-precision MXU inputs with f32 accumulation."""
    if matmul_dtype is not None:
        xm = x.astype(matmul_dtype)
        w1 = w1.astype(matmul_dtype)
        w2 = w2.astype(matmul_dtype)
    else:
        xm = x
    h = jnp.einsum("bld,dh->blh", xm, w1,
                   preferred_element_type=jnp.float32) + b1
    h = _gelu_tanh(h)
    if matmul_dtype is not None:
        h = h.astype(matmul_dtype)
    y = jnp.einsum("blh,hd->bld", h, w2,
                   preferred_element_type=jnp.float32) + b2
    y = y + x.astype(jnp.float32)
    mean = jnp.mean(y, axis=-1, keepdims=True)
    var = jnp.mean((y - mean) ** 2, axis=-1, keepdims=True)
    return (y - mean) * jax.lax.rsqrt(var + _LN_EPS) * gamma + beta


if __name__ == "__main__":
    B, L, d_in, d_hid = 2, 8, 32, 64

    key = jax.random.PRNGKey(0)
    kx, k1, kb1, k2, kb2 = jax.random.split(key, 5)

    x = jax.random.normal(kx, (B, L, d_in), dtype=jnp.float32)

    # Deterministic parameter init (Conv1d weight (out, in, 1) stored transposed
    # as (in, out)); LayerNorm defaults gamma=1, beta=0.
    bound1 = 1.0 / math.sqrt(d_in)
    w1 = jax.random.uniform(k1, (d_in, d_hid), jnp.float32, -bound1, bound1)
    b1 = jax.random.uniform(kb1, (d_hid,), jnp.float32, -bound1, bound1)
    bound2 = 1.0 / math.sqrt(d_hid)
    w2 = jax.random.uniform(k2, (d_hid, d_in), jnp.float32, -bound2, bound2)
    b2 = jax.random.uniform(kb2, (d_in,), jnp.float32, -bound2, bound2)
    gamma = jnp.ones((d_in,), jnp.float32)
    beta = jnp.zeros((d_in,), jnp.float32)

    out = positionwise_feed_forward(x, w1, b1, w2, b2, gamma, beta)
    out = jax.block_until_ready(out)
    assert out.shape == (B, L, d_in)

    # Tight check against a reference that mimics bf16 MXU inputs / f32 accum.
    ref_bf16 = _reference(x, w1, b1, w2, b2, gamma, beta, matmul_dtype=jnp.bfloat16)
    err = float(jnp.max(jnp.abs(out - ref_bf16)))
    assert jnp.allclose(out, ref_bf16, atol=5e-3, rtol=5e-3), err

    # Sanity check against the pure-f32 reference (bf16 matmul noise allowed).
    ref_f32 = _reference(x, w1, b1, w2, b2, gamma, beta)
    assert jnp.allclose(out, ref_f32, atol=5e-2, rtol=5e-2), float(
        jnp.max(jnp.abs(out - ref_f32)))

    # Exercise the non-divisible (padded tail) path: rows = 2*37 = 74, tm=32.
    x2 = jax.random.normal(jax.random.PRNGKey(1), (B, 37, d_in), dtype=jnp.float32)
    out2 = jax.block_until_ready(
        positionwise_feed_forward(x2, w1, b1, w2, b2, gamma, beta, tm=32))
    ref2 = _reference(x2, w1, b1, w2, b2, gamma, beta, matmul_dtype=jnp.bfloat16)
    assert out2.shape == x2.shape
    assert jnp.allclose(out2, ref2, atol=5e-3, rtol=5e-3), float(
        jnp.max(jnp.abs(out2 - ref2)))

    print("KERNEL_OK")
</pallas_src>

<mosaic_0001>
module attributes {stable_mosaic.version = 11 : i64} {
  func.func @_ffn_kernel(%arg0: i32, %arg1: memref<16x32xf32, #tpu.memory_space<vmem>>, %arg2: memref<32x64xbf16, #tpu.memory_space<vmem>>, %arg3: memref<1x64xf32, #tpu.memory_space<vmem>>, %arg4: memref<64x32xbf16, #tpu.memory_space<vmem>>, %arg5: memref<1x32xf32, #tpu.memory_space<vmem>>, %arg6: memref<1x32xf32, #tpu.memory_space<vmem>>, %arg7: memref<1x32xf32, #tpu.memory_space<vmem>>, %arg8: memref<16x32xf32, #tpu.memory_space<vmem>>) attributes {dimension_semantics = [#tpu.dimension_semantics<parallel>], iteration_bounds = array<i64: 1>, scalar_prefetch = 0 : i64, scratch_operands = 0 : i64, tpu.core_type = #tpu.core_type<tc>, window_params = [{transform_indices = @transform_0, window_bounds = array<i64: 16, 32>}, {pipeline_mode = #tpu.pipeline_mode<synchronous>, transform_indices = @transform_1, window_bounds = array<i64: 32, 64>}, {pipeline_mode = #tpu.pipeline_mode<synchronous>, transform_indices = @transform_2, window_bounds = array<i64: 1, 64>}, {pipeline_mode = #tpu.pipeline_mode<synchronous>, transform_indices = @transform_3, window_bounds = array<i64: 64, 32>}, {pipeline_mode = #tpu.pipeline_mode<synchronous>, transform_indices = @transform_4, window_bounds = array<i64: 1, 32>}, {pipeline_mode = #tpu.pipeline_mode<synchronous>, transform_indices = @transform_5, window_bounds = array<i64: 1, 32>}, {pipeline_mode = #tpu.pipeline_mode<synchronous>, transform_indices = @transform_6, window_bounds = array<i64: 1, 32>}, {transform_indices = @transform_7, window_bounds = array<i64: 16, 32>}]} {
    %c0 = arith.constant 0 : index
    %c0_0 = arith.constant 0 : index
    %0 = vector.load %arg1[%c0, %c0_0] : memref<16x32xf32, #tpu.memory_space<vmem>>, vector<16x32xf32>
    %1 = arith.truncf %0 : vector<16x32xf32> to vector<16x32xbf16>
    %c0_1 = arith.constant 0 : index
    %c0_2 = arith.constant 0 : index
    %2 = vector.load %arg1[%c0_1, %c0_2] : memref<16x32xf32, #tpu.memory_space<vmem>>, vector<16x32xf32>
    %c0_3 = arith.constant 0 : index
    %c0_4 = arith.constant 0 : index
    %3 = vector.load %arg2[%c0_3, %c0_4] : memref<32x64xbf16, #tpu.memory_space<vmem>>, vector<32x64xbf16>
    %cst = arith.constant dense<0.000000e+00> : vector<16x64xf32>
    %4 = tpu.matmul %1, %3, %cst {dimension_numbers = #tpu.dot_dimension_numbers<[1], [0], [0], [1], [0, 0, 1, 1], [], []>} : vector<16x32xbf16>, vector<32x64xbf16>, vector<16x64xf32> -> vector<16x64xf32>
    %c0_5 = arith.constant 0 : index
    %c0_6 = arith.constant 0 : index
    %5 = vector.load %arg3[%c0_5, %c0_6] : memref<1x64xf32, #tpu.memory_space<vmem>>, vector<1x64xf32>
    %6 = vector.broadcast %5 : vector<1x64xf32> to vector<16x64xf32>
    %7 = arith.addf %4, %6 : vector<16x64xf32>
    %cst_7 = arith.constant 5.000000e-01 : f32
    %8 = vector.broadcast %cst_7 : f32 to vector<16x64xf32>
    %9 = arith.mulf %8, %7 : vector<16x64xf32>
    %cst_8 = arith.constant 4.471500e-02 : f32
    %10 = vector.broadcast %cst_8 : f32 to vector<16x64xf32>
    %11 = arith.mulf %10, %7 : vector<16x64xf32>
    %12 = arith.mulf %11, %7 : vector<16x64xf32>
    %13 = arith.mulf %12, %7 : vector<16x64xf32>
    %14 = arith.addf %7, %13 : vector<16x64xf32>
    %cst_9 = arith.constant 0.797884583 : f32
    %15 = vector.broadcast %cst_9 : f32 to vector<16x64xf32>
    %16 = arith.mulf %15, %14 : vector<16x64xf32>
    %17 = math.tanh %16 : vector<16x64xf32>
    %cst_10 = arith.constant 1.000000e+00 : f32
    %18 = vector.broadcast %cst_10 : f32 to vector<16x64xf32>
    %19 = arith.addf %18, %17 : vector<16x64xf32>
    %20 = arith.mulf %9, %19 : vector<16x64xf32>
    %21 = arith.truncf %20 : vector<16x64xf32> to vector<16x64xbf16>
    %c0_11 = arith.constant 0 : index
    %c0_12 = arith.constant 0 : index
    %22 = vector.load %arg4[%c0_11, %c0_12] : memref<64x32xbf16, #tpu.memory_space<vmem>>, vector<64x32xbf16>
    %cst_13 = arith.constant dense<0.000000e+00> : vector<16x32xf32>
    %23 = tpu.matmul %21, %22, %cst_13 {dimension_numbers = #tpu.dot_dimension_numbers<[1], [0], [0], [1], [0, 0, 1, 1], [], []>} : vector<16x64xbf16>, vector<64x32xbf16>, vector<16x32xf32> -> vector<16x32xf32>
    %c0_14 = arith.constant 0 : index
    %c0_15 = arith.constant 0 : index
    %24 = vector.load %arg5[%c0_14, %c0_15] : memref<1x32xf32, #tpu.memory_space<vmem>>, vector<1x32xf32>
    %25 = vector.broadcast %24 : vector<1x32xf32> to vector<16x32xf32>
    %26 = arith.addf %23, %25 : vector<16x32xf32>
    %27 = arith.addf %26, %2 : vector<16x32xf32>
    %cst_16 = arith.constant dense<0.000000e+00> : vector<16xf32>
    %28 = vector.multi_reduction <add>, %27, %cst_16 [1] : vector<16x32xf32> to vector<16xf32>
    %29 = vector.shape_cast %28 : vector<16xf32> to vector<16x1xf32>
    %cst_17 = arith.constant 3.200000e+01 : f32
    %30 = vector.broadcast %cst_17 : f32 to vector<16x1xf32>
    %31 = arith.divf %29, %30 : vector<16x1xf32>
    %32 = vector.broadcast %31 : vector<16x1xf32> to vector<16x32xf32>
    %33 = arith.subf %27, %32 : vector<16x32xf32>
    %34 = arith.mulf %33, %33 : vector<16x32xf32>
    %cst_18 = arith.constant dense<0.000000e+00> : vector<16xf32>
    %35 = vector.multi_reduction <add>, %34, %cst_18 [1] : vector<16x32xf32> to vector<16xf32>
    %36 = vector.shape_cast %35 : vector<16xf32> to vector<16x1xf32>
    %cst_19 = arith.constant 3.200000e+01 : f32
    %37 = vector.broadcast %cst_19 : f32 to vector<16x1xf32>
    %38 = arith.divf %36, %37 : vector<16x1xf32>
    %cst_20 = arith.constant 9.99999974E-6 : f32
    %39 = vector.broadcast %cst_20 : f32 to vector<16x1xf32>
    %40 = arith.addf %38, %39 : vector<16x1xf32>
    %41 = math.rsqrt %40 : vector<16x1xf32>
    %42 = vector.broadcast %41 : vector<16x1xf32> to vector<16x32xf32>
    %43 = arith.mulf %33, %42 : vector<16x32xf32>
    %c0_21 = arith.constant 0 : index
    %c0_22 = arith.constant 0 : index
    %44 = vector.load %arg6[%c0_21, %c0_22] : memref<1x32xf32, #tpu.memory_space<vmem>>, vector<1x32xf32>
    %45 = vector.broadcast %44 : vector<1x32xf32> to vector<16x32xf32>
    %46 = arith.mulf %43, %45 : vector<16x32xf32>
    %c0_23 = arith.constant 0 : index
    %c0_24 = arith.constant 0 : index
    %47 = vector.load %arg7[%c0_23, %c0_24] : memref<1x32xf32, #tpu.memory_space<vmem>>, vector<1x32xf32>
    %48 = vector.broadcast %47 : vector<1x32xf32> to vector<16x32xf32>
    %49 = arith.addf %46, %48 : vector<16x32xf32>
    %c0_25 = arith.constant 0 : index
    %c0_26 = arith.constant 0 : index
    %50 = vector.load %arg8[%c0_25, %c0_26] : memref<16x32xf32, #tpu.memory_space<vmem>>, vector<16x32xf32>
    tpu.vector_store %arg8[%c0_25, %c0_26], %49 {strides = array<i32>} : memref<16x32xf32, #tpu.memory_space<vmem>>, vector<16x32xf32>,
    return
  }
  func.func @transform_0(%arg0: i32) -> (i32, i32) {
    %c0_i32 = arith.constant 0 : i32
    %c0_i32_0 = arith.constant 0 : i32
    return %arg0, %c0_i32 : i32, i32
  }
  func.func @transform_1(%arg0: i32) -> (i32, i32) {
    %c0_i32 = arith.constant 0 : i32
    %c0_i32_0 = arith.constant 0 : i32
    %c0_i32_1 = arith.constant 0 : i32
    return %c0_i32, %c0_i32_0 : i32, i32
  }
  func.func @transform_2(%arg0: i32) -> (i32, i32) {
    %c0_i32 = arith.constant 0 : i32
    %c0_i32_0 = arith.constant 0 : i32
    %c0_i32_1 = arith.constant 0 : i32
    return %c0_i32, %c0_i32_0 : i32, i32
  }
  func.func @transform_3(%arg0: i32) -> (i32, i32) {
    %c0_i32 = arith.constant 0 : i32
    %c0_i32_0 = arith.constant 0 : i32
    %c0_i32_1 = arith.constant 0 : i32
    return %c0_i32, %c0_i32_0 : i32, i32
  }
  func.func @transform_4(%arg0: i32) -> (i32, i32) {
    %c0_i32 = arith.constant 0 : i32
    %c0_i32_0 = arith.constant 0 : i32
    %c0_i32_1 = arith.constant 0 : i32
    return %c0_i32, %c0_i32_0 : i32, i32
  }
  func.func @transform_5(%arg0: i32) -> (i32, i32) {
    %c0_i32 = arith.constant 0 : i32
    %c0_i32_0 = arith.constant 0 : i32
    %c0_i32_1 = arith.constant 0 : i32
    return %c0_i32, %c0_i32_0 : i32, i32
  }
  func.func @transform_6(%arg0: i32) -> (i32, i32) {
    %c0_i32 = arith.constant 0 : i32
    %c0_i32_0 = arith.constant 0 : i32
    %c0_i32_1 = arith.constant 0 : i32
    return %c0_i32, %c0_i32_0 : i32, i32
  }
  func.func @transform_7(%arg0: i32) -> (i32, i32) {
    %c0_i32 = arith.constant 0 : i32
    %c0_i32_0 = arith.constant 0 : i32
    return %arg0, %c0_i32 : i32, i32
  }
}

</mosaic_0001>

<llo_original>
// kernel: tpu_custom_call.1
$region0: #{tpu_custom_call.1}
  #allocation0 [shape = 'u32[]', space=smem, size = 0x4, offset = 0x4, fixed_abs, tag = 'smem constant byte address 0x4 - core index']
  #allocation1 [shape = 'u32[144,128]{1,0:T(1,128)}', space=vmem, size = 0x12000, scoped, tag = 'internal scratch']
  %s0 = inlined_call_operand.hbm [shape: f32[16,32], index: 0, kind: input, shape index: {}]
  %s1 = inlined_call_operand.hbm [shape: bf16[32,64], index: 1, kind: input, shape index: {}]
  %s2 = inlined_call_operand.hbm [shape: f32[1,64], index: 2, kind: input, shape index: {}]
  %s3 = inlined_call_operand.hbm [shape: bf16[64,32], index: 3, kind: input, shape index: {}]
  %s4 = inlined_call_operand.hbm [shape: f32[1,32], index: 4, kind: input, shape index: {}]
  %s5 = inlined_call_operand.hbm [shape: f32[1,32], index: 5, kind: input, shape index: {}]
  %s6 = inlined_call_operand.hbm [shape: f32[1,32], index: 6, kind: input, shape index: {}]
  %s7 = inlined_call_operand.hbm [shape: f32[16,32], index: 7, kind: output, shape index: {}]
  %s8 = sld [smem:[#allocation0]]
  $region66: #{tpu_custom_call.1} parent=0
    _
  %s10 = ssub.s32 1, %s8
  %s11 = scalar_select 0, %s10, %s8
  $region1: #{tpu_custom_call.1} parent=0
    #allocation2 [shape = 'u8[8192]{0}', space=vmem, size = 0x2000, scoped, tag = 'input window, operand 0, single buffered']
    #allocation3 [shape = 's32[1]{0}', space=sflag, size = 0x4, scoped, tag = 'scoped memory for tpu_custom_call.1']
    #allocation4 [shape = 's32[1]{0}', space=sflag, size = 0x4, scoped, tag = 'scoped memory for tpu_custom_call.1']
    #allocation5 [shape = 'u8[8192]{0}', space=vmem, size = 0x2000, scoped, tag = 'input window, operand 1, single buffered']
    #allocation6 [shape = 's32[1]{0}', space=sflag, size = 0x4, scoped, tag = 'scoped memory for tpu_custom_call.1']
    #allocation7 [shape = 'u8[512]{0}', space=vmem, size = 0x400, scoped, tag = 'input window, operand 2, single buffered']
    #allocation8 [shape = 'u8[16384]{0}', space=vmem, size = 0x4000, scoped, tag = 'input window, operand 3, single buffered']
    #allocation9 [shape = 's32[1]{0}', space=sflag, size = 0x4, scoped, tag = 'scoped memory for tpu_custom_call.1']
    #allocation10 [shape = 'u8[512]{0}', space=vmem, size = 0x400, scoped, tag = 'input window, operand 4, single buffered']
    #allocation11 [shape = 'u8[512]{0}', space=vmem, size = 0x400, scoped, tag = 'input window, operand 5, single buffered']
    #allocation12 [shape = 's32[1]{0}', space=sflag, size = 0x4, scoped, tag = 'scoped memory for tpu_custom_call.1']
    #allocation13 [shape = 'u8[512]{0}', space=vmem, size = 0x400, scoped, tag = 'input window, operand 6, single buffered']
    #allocation14 [shape = 'u8[8192]{0}', space=vmem, size = 0x2000, scoped, tag = 'output window, operand 0, single buffered']
    %12 = vsyncpa [#allocation3], 0
    %13 = vsyncpa [#allocation6], 0
    %14 = vsyncpa [#allocation9], 0
    %15 = vsyncpa [#allocation12], 0
    %16 = vsyncpa [#allocation4], 0
    // Predicated region
    $region2: #{tpu_custom_call.1} parent=1 // pred_check
      _
    $region3: #{tpu_custom_call.1} parent=1 // pred_check_branch
      %18 = sbr.rel (0) target = $region5
    $region4: #{tpu_custom_call.1} parent=1 // pred_region
      %s20 = ssub.s32 256, 256
      %21 = vsyncadd [#allocation3], %s20
      %s22 = sshll.u32 [#allocation2], 4
      %s23 = int_to_ptr.vmem [resolvable:$true] %s22
      %28 = dma.hbm_to_vmem [thread:$0]  %s0, 256, %s23, [#allocation3], 128, 128, 8
    $region5: #{tpu_custom_call.1} parent=1 // pred_fallthru
      _
    // Predicated region
    $region6: #{tpu_custom_call.1} parent=1 // pred_check
      _
    $region7: #{tpu_custom_call.1} parent=1 // pred_check_branch
      %30 = sbr.rel (0) target = $region9
    $region8: #{tpu_custom_call.1} parent=1 // pred_region
      %s32 = ssub.s32 256, 256
      %33 = vsyncadd [#allocation6], %s32
      %s34 = sshll.u32 [#allocation5], 4
      %s35 = int_to_ptr.vmem [resolvable:$true] %s34
      %40 = dma.hbm_to_vmem [thread:$0]  %s1, 256, %s35, [#allocation6], 64, 64, 4
    $region9: #{tpu_custom_call.1} parent=1 // pred_fallthru
      _
    // Predicated region
    $region10: #{tpu_custom_call.1} parent=1 // pred_check
      _
    $region11: #{tpu_custom_call.1} parent=1 // pred_check_branch
      %42 = sbr.rel (0) target = $region13
    $region12: #{tpu_custom_call.1} parent=1 // pred_region
      %s44 = ssub.s32 16, 16
      %45 = vsyncadd [#allocation6], %s44
      %s47 = sshll.u32 [#allocation7], 4
      %s48 = int_to_ptr.vmem [resolvable:$true] %s47
      %50 = dma.hbm_to_vmem [thread:$0]  %s2, 16, %s48, [#allocation6]
    $region13: #{tpu_custom_call.1} parent=1 // pred_fallthru
      _
    // Predicated region
    $region14: #{tpu_custom_call.1} parent=1 // pred_check
      _
    $region15: #{tpu_custom_call.1} parent=1 // pred_check_branch
      %52 = sbr.rel (0) target = $region17
    $region16: #{tpu_custom_call.1} parent=1 // pred_region
      %s54 = ssub.s32 512, 512
      %55 = vsyncadd [#allocation9], %s54
      %s56 = sshll.u32 [#allocation8], 4
      %s57 = int_to_ptr.vmem [resolvable:$true] %s56
      %62 = dma.hbm_to_vmem [thread:$0]  %s3, 512, %s57, [#allocation9], 64, 64, 4
    $region17: #{tpu_custom_call.1} parent=1 // pred_fallthru
      _
    // Predicated region
    $region18: #{tpu_custom_call.1} parent=1 // pred_check
      _
    $region19: #{tpu_custom_call.1} parent=1 // pred_check_branch
      %64 = sbr.rel (0) target = $region21
    $region20: #{tpu_custom_call.1} parent=1 // pred_region
      %s66 = ssub.s32 16, 16
      %67 = vsyncadd [#allocation9], %s66
      %s69 = sshll.u32 [#allocation10], 4
      %s70 = int_to_ptr.vmem [resolvable:$true] %s69
      %72 = dma.hbm_to_vmem [thread:$0]  %s4, 16, %s70, [#allocation9]
    $region21: #{tpu_custom_call.1} parent=1 // pred_fallthru
      _
    // Predicated region
    $region22: #{tpu_custom_call.1} parent=1 // pred_check
      _
    $region23: #{tpu_custom_call.1} parent=1 // pred_check_branch
      %74 = sbr.rel (0) target = $region25
    $region24: #{tpu_custom_call.1} parent=1 // pred_region
      %s76 = ssub.s32 16, 16
      %77 = vsyncadd [#allocation12], %s76
      %s79 = sshll.u32 [#allocation11], 4
      %s80 = int_to_ptr.vmem [resolvable:$true] %s79
      %82 = dma.hbm_to_vmem [thread:$0]  %s5, 16, %s80, [#allocation12]
    $region25: #{tpu_custom_call.1} parent=1 // pred_fallthru
      _
    // Predicated region
    $region26: #{tpu_custom_call.1} parent=1 // pred_check
      _
    $region27: #{tpu_custom_call.1} parent=1 // pred_check_branch
      %84 = sbr.rel (0) target = $region29
    $region28: #{tpu_custom_call.1} parent=1 // pred_region
      %s86 = ssub.s32 16, 16
      %87 = vsyncadd [#allocation12], %s86
      %s89 = sshll.u32 [#allocation13], 4
      %s90 = int_to_ptr.vmem [resolvable:$true] %s89
      %92 = dma.hbm_to_vmem [thread:$0]  %s6, 16, %s90, [#allocation12]
    $region29: #{tpu_custom_call.1} parent=1 // pred_fallthru
      _
    // Predicated region
    $region30: #{tpu_custom_call.1} parent=1 // pred_check
      _
    $region31: #{tpu_custom_call.1} parent=1 // pred_check_branch
      %94 = sbr.rel (0) target = $region33
    $region32: #{tpu_custom_call.1} parent=1 // pred_region
      %95 = dma.done [#allocation3], 256
    $region33: #{tpu_custom_call.1} parent=1 // pred_fallthru
      _
    // Predicated region
    $region34: #{tpu_custom_call.1} parent=1 // pred_check
      _
    $region35: #{tpu_custom_call.1} parent=1 // pred_check_branch
      %97 = sbr.rel (0) target = $region37
    $region36: #{tpu_custom_call.1} parent=1 // pred_region
      %98 = dma.done [#allocation6], 256
    $region37: #{tpu_custom_call.1} parent=1 // pred_fallthru
      _
    // Predicated region
    $region38: #{tpu_custom_call.1} parent=1 // pred_check
      _
    $region39: #{tpu_custom_call.1} parent=1 // pred_check_branch
      %100 = sbr.rel (0) target = $region41
    $region40: #{tpu_custom_call.1} parent=1 // pred_region
      %101 = dma.done [#allocation6], 16
    $region41: #{tpu_custom_call.1} parent=1 // pred_fallthru
      _
    // Predicated region
    $region42: #{tpu_custom_call.1} parent=1 // pred_check
      _
    $region43: #{tpu_custom_call.1} parent=1 // pred_check_branch
      %103 = sbr.rel (0) target = $region45
    $region44: #{tpu_custom_call.1} parent=1 // pred_region
      %104 = dma.done [#allocation9], 512
    $region45: #{tpu_custom_call.1} parent=1 // pred_fallthru
      _
    // Predicated region
    $region46: #{tpu_custom_call.1} parent=1 // pred_check
      _
    $region47: #{tpu_custom_call.1} parent=1 // pred_check_branch
      %106 = sbr.rel (0) target = $region49
    $region48: #{tpu_custom_call.1} parent=1 // pred_region
      %107 = dma.done [#allocation9], 16
    $region49: #{tpu_custom_call.1} parent=1 // pred_fallthru
      _
    // Predicated region
    $region50: #{tpu_custom_call.1} parent=1 // pred_check
      _
    $region51: #{tpu_custom_call.1} parent=1 // pred_check_branch
      %109 = sbr.rel (0) target = $region53
    $region52: #{tpu_custom_call.1} parent=1 // pred_region
      %110 = dma.done [#allocation12], 16
    $region53: #{tpu_custom_call.1} parent=1 // pred_fallthru
      _
    // Predicated region
    $region54: #{tpu_custom_call.1} parent=1 // pred_check
      _
    $region55: #{tpu_custom_call.1} parent=1 // pred_check_branch
      %112 = sbr.rel (0) target = $region57
    $region56: #{tpu_custom_call.1} parent=1 // pred_region
      %113 = dma.done [#allocation12], 16
    $region57: #{tpu_custom_call.1} parent=1 // pred_fallthru
      _
    %v115 = vld [vmem:[#allocation2] sm:$0xff]
    %v116 = vld [vmem:[#allocation2 + $0x8] sm:$0xff]
    %v117 = vpack.c.bf16 %v116, %v115
    %v118 = vld [vmem:[#allocation5] sm:$0xf]
    %v119 = vld [vmem:[#allocation5 + $0x4] sm:$0xf]
    %v120 = vld [vmem:[#allocation5 + $0x8] sm:$0xf]
    %v121 = vld [vmem:[#allocation5 + $0xc] sm:$0xf]
    %v122 = vld [vmem:[#allocation7] sm:$0x1]
    %v124 = vlaneseq
    %v125 = vshrl.u32 %v124, 7
    %v126 = vsub.s32 0, %v125
    %v127 = vrot.slane %v122, %v126
    %v133 = vunpack.c.l.b16 %v118
    %v134 = vunpack.c.l.b16 %v119
    %v135 = vunpack.c.l.b16 %v120
    %v136 = vunpack.c.l.b16 %v121
    %v137 = vpack.c.b16 %v134, %v133
    %v138 = vpack.c.b16 %v136, %v135
    %vm141 = vcmask 261120
    %v143 = vsel %vm141, %v117, 0
    %145 = vmatprep.subr.bf16.mxu0 0
    %146 = vmatpush1.bf16.msra.mxu0 %v137
    %147 = vmatprep.subr.bf16.mxu0 0
    %148 = vmatpush1.bf16.msra.mxu0 %v138
    %149 = vmatprep.subr.bf16.mxu0 0
    %150 = vmatpush1.bf16.msra.mxu0 0
    %151 = vmatprep.subr.bf16.mxu0 0
    %152 = vmatpush1.bf16.msra.mxu0 0
    %153 = vmatprep.subr.bf16.mxu0 0
    %154 = vmatpush1.bf16.msra.mxu0 0
    %155 = vmatprep.subr.bf16.mxu0 0
    %156 = vmatpush1.bf16.msra.mxu0 0
    %157 = vmatprep.subr.bf16.mxu0 0
    %158 = vmatpush1.bf16.msra.mxu0 0
    %159 = vmatprep.subr.bf16.mxu0 0
    %160 = vmatpush1.bf16.msra.mxu0 0
    %161 = vmatprep.subr.bf16.mxu0 0
    %162 = vmatpush1.bf16.msra.mxu0 0
    %163 = vmatprep.subr.bf16.mxu0 0
    %164 = vmatpush1.bf16.msra.mxu0 0
    %165 = vmatprep.subr.bf16.mxu0 0
    %166 = vmatpush1.bf16.msra.mxu0 0
    %167 = vmatprep.subr.bf16.mxu0 0
    %168 = vmatpush1.bf16.msra.mxu0 0
    %169 = vmatprep.subr.bf16.mxu0 0
    %170 = vmatpush1.bf16.msra.mxu0 0
    %171 = vmatprep.subr.bf16.mxu0 0
    %172 = vmatpush1.bf16.msra.mxu0 0
    %173 = vmatprep.subr.bf16.mxu0 0
    %174 = vmatpush1.bf16.msra.mxu0 0
    %175 = vmatprep.subr.bf16.mxu0 0
    %176 = vmatpush1.bf16.msra.mxu0 0
    %177 = vmatprep.mubr.bf16.mxu0 0
    %178 = vmatmul.mubr.bf16.gmra.mrb[0].mxu0 %v143
    %v179 = vpop.f32.mrb[0].mxu0
    %v180 = vadd.f32 %v127, %v179
    %v181 = vpop.f32.mrb[0].mxu0
    %v182 = vpop.f32.mrb[0].mxu0
    %v183 = vadd.f32 %v127, %v182
    %v184 = vpop.f32.mrb[0].mxu0
    %185 = vdwg.mxu0
    %v186 = vmul.f32 %v180, 0.5
    %v187 = vmul.f32 %v183, 0.5
    %v188 = vmul.f32 %v180, 0.044715
    %v189 = vmul.f32 %v183, 0.044715
    %v190 = vmul.f32 %v188, %v180
    %v191 = vmul.f32 %v189, %v183
    %v192 = vmul.f32 %v190, %v180
    %v193 = vmul.f32 %v191, %v183
    %v194 = vadd.f32 %v180, %v192
    %v195 = vadd.f32 %v183, %v193
    %v196 = vmul.f32 %v194, 0.7978846
    %v197 = vmul.f32 %v195, 0.7978846
    %v198 = vtanh.pop %v196
    %v199 = vtanh.pop %v197
    %v200 = vadd.f32 %v198, 1.0
    %v201 = vadd.f32 %v199, 1.0
    %v202 = vmul.f32 %v186, %v200
    %v203 = vmul.f32 %v187, %v201
    %v204 = vpack.c.bf16 %v203, %v202
    %v205 = vld [vmem:[#allocation8] sm:$0xf]
    %v206 = vld [vmem:[#allocation8 + $0x4] sm:$0xf]
    %v207 = vld [vmem:[#allocation8 + $0x8] sm:$0xf]
    %v208 = vld [vmem:[#allocation8 + $0xc] sm:$0xf]
    %v209 = vld [vmem:[#allocation8 + $0x10] sm:$0xf]
    %v210 = vld [vmem:[#allocation8 + $0x14] sm:$0xf]
    %v211 = vld [vmem:[#allocation8 + $0x18] sm:$0xf]
    %v212 = vld [vmem:[#allocation8 + $0x1c] sm:$0xf]
    %v213 = vld [vmem:[#allocation10] sm:$0x1]
    %v215 = vlaneseq
    %v216 = vshrl.u32 %v215, 7
    %v217 = vsub.s32 0, %v216
    %v218 = vrot.slane %v213, %v217
    %v228 = vunpack.c.l.b16 %v205
    %v229 = vunpack.c.l.b16 %v206
    %v230 = vunpack.c.l.b16 %v207
    %v231 = vunpack.c.l.b16 %v208
    %v232 = vunpack.c.l.b16 %v209
    %v233 = vunpack.c.l.b16 %v210
    %v234 = vunpack.c.l.b16 %v211
    %v235 = vunpack.c.l.b16 %v212
    %v236 = vpack.c.b16 %v229, %v228
    %v237 = vpack.c.b16 %v231, %v230
    %v238 = vpack.c.b16 %v233, %v232
    %v239 = vpack.c.b16 %v235, %v234
    %vm244 = vcmask 523264
    %v246 = vsel %vm244, %v204, 0
    %248 = vmatprep.subr.bf16.mxu0 0
    %249 = vmatpush1.bf16.msra.mxu0 %v236
    %250 = vmatprep.subr.bf16.mxu0 0
    %251 = vmatpush1.bf16.msra.mxu0 %v237
    %252 = vmatprep.subr.bf16.mxu0 0
    %253 = vmatpush1.bf16.msra.mxu0 %v238
    %254 = vmatprep.subr.bf16.mxu0 0
    %255 = vmatpush1.bf16.msra.mxu0 %v239
    %256 = vmatprep.subr.bf16.mxu0 0
    %257 = vmatpush1.bf16.msra.mxu0 0
    %258 = vmatprep.subr.bf16.mxu0 0
    %259 = vmatpush1.bf16.msra.mxu0 0
    %260 = vmatprep.subr.bf16.mxu0 0
    %261 = vmatpush1.bf16.msra.mxu0 0
    %262 = vmatprep.subr.bf16.mxu0 0
    %263 = vmatpush1.bf16.msra.mxu0 0
    %264 = vmatprep.subr.bf16.mxu0 0
    %265 = vmatpush1.bf16.msra.mxu0 0
    %266 = vmatprep.subr.bf16.mxu0 0
    %267 = vmatpush1.bf16.msra.mxu0 0
    %268 = vmatprep.subr.bf16.mxu0 0
    %269 = vmatpush1.bf16.msra.mxu0 0
    %270 = vmatprep.subr.bf16.mxu0 0
    %271 = vmatpush1.bf16.msra.mxu0 0
    %272 = vmatprep.subr.bf16.mxu0 0
    %273 = vmatpush1.bf16.msra.mxu0 0
    %274 = vmatprep.subr.bf16.mxu0 0
    %275 = vmatpush1.bf16.msra.mxu0 0
    %276 = vmatprep.subr.bf16.mxu0 0
    %277 = vmatpush1.bf16.msra.mxu0 0
    %278 = vmatprep.subr.bf16.mxu0 0
    %279 = vmatpush1.bf16.msra.mxu0 0
    %280 = vmatprep.mubr.bf16.mxu0 0
    %281 = vmatmul.mubr.bf16.gmra.mrb[0].mxu0 %v246
    %v282 = vpop.f32.mrb[0].mxu0
    %v283 = vadd.f32 %v218, %v282
    %v284 = vpop.f32.mrb[0].mxu0
    %v285 = vpop.f32.mrb[0].mxu0
    %v286 = vadd.f32 %v218, %v285
    %v287 = vpop.f32.mrb[0].mxu0
    %288 = vdwg.mxu0
    %v289 = vadd.f32 %v283, %v115
    %v290 = vadd.f32 %v286, %v116
    %v291 = vsel %vm141, %v289, 0.0
    %292 = vadd.xlane.f32.xlu0 %v291
    %v293 = vpop.xlane.xlu0 %292
    %v294 = vsel %vm141, %v290, 0.0
    %295 = vadd.xlane.f32.xlu0 %v294
    %v296 = vpop.xlane.xlu0 %295
    %v297 = vrcp.pop 32.0
    %v298 = vmul.f32 %v293, %v297
    %v299 = vmul.f32 %v296, %v297
    %v300 = vsub.f32 %v289, %v298
    %v301 = vsub.f32 %v290, %v299
    %v302 = vmul.f32 %v300, %v300
    %v303 = vmul.f32 %v301, %v301
    %v304 = vsel %vm141, %v302, 0.0
    %305 = vadd.xlane.f32.xlu0 %v304
    %v306 = vpop.xlane.xlu0 %305
    %v307 = vsel %vm141, %v303, 0.0
    %308 = vadd.xlane.f32.xlu0 %v307
    %v309 = vpop.xlane.xlu0 %308
    %v310 = vmul.f32 %v306, %v297
    %v311 = vmul.f32 %v309, %v297
    %v312 = vadd.f32 %v310, 1e-05
    %v313 = vadd.f32 %v311, 1e-05
    %v314 = vrsqrt.pop %v312
    %v315 = vrsqrt.pop %v313
    %v316 = vmul.f32 %v300, %v314
    %v317 = vmul.f32 %v301, %v315
    %v318 = vld [vmem:[#allocation11] sm:$0x1]
    %v320 = vlaneseq
    %v321 = vshrl.u32 %v320, 7
    %v322 = vsub.s32 0, %v321
    %v323 = vrot.slane %v318, %v322
    %v325 = vmul.f32 %v316, %v323
    %v326 = vmul.f32 %v317, %v323
    %v327 = vld [vmem:[#allocation13] sm:$0x1]
    %v329 = vlaneseq
    %v330 = vshrl.u32 %v329, 7
    %v331 = vsub.s32 0, %v330
    %v332 = vrot.slane %v327, %v331
    %v334 = vadd.f32 %v325, %v332
    %v335 = vadd.f32 %v326, %v332
    %336 = vst.msk [vmem:[#allocation14] sm:$0xff] %vm141, %v334
    %337 = vst.msk [vmem:[#allocation14 + $0x8] sm:$0xff] %vm141, %v335
    // Predicated region
    $region58: #{tpu_custom_call.1} parent=1 // pred_check
      _
    $region59: #{tpu_custom_call.1} parent=1 // pred_check_branch
      %339 = sbr.rel (0) target = $region61
    $region60: #{tpu_custom_call.1} parent=1 // pred_region
      %s341 = ssub.s32 256, 256
      %342 = vsyncadd [#allocation4], %s341
      %s343 = sshll.u32 [#allocation14], 4
      %s344 = int_to_ptr.vmem [resolvable:$true] %s343
      %349 = dma.vmem_to_hbm [thread:$0]  %s344, 256, %s7, [#allocation4], 128, 128, 8
    $region61: #{tpu_custom_call.1} parent=1 // pred_fallthru
      _
    // Predicated region
    $region62: #{tpu_custom_call.1} parent=1 // pred_check
      _
    $region63: #{tpu_custom_call.1} parent=1 // pred_check_branch
      %351 = sbr.rel (0) target = $region65
    $region64: #{tpu_custom_call.1} parent=1 // pred_region
      %352 = dma.done [#allocation4], 256
    $region65: #{tpu_custom_call.1} parent=1 // pred_fallthru
      _
    %353 = vsyncpa [#allocation3], 1
    %354 = vsyncpa [#allocation6], 1
    %355 = vsyncpa [#allocation9], 1
    %356 = vsyncpa [#allocation12], 1
    %357 = vsyncpa [#allocation4], 1

</llo_original>
